<compile_context>
chip_gen: v7x
topology: tpu7x:2x2x1
jax: 0.10.0
libtpu: 0.0.40
codegen_flags: <defaults>
</compile_context>

<pallas_src>
import jax
import jax.numpy as jnp
from jax.experimental import pallas as pl
from jax.experimental.pallas import tpu as pltpu

HIDDEN = 10     # fc1 out_features / fc2 in_features
J_PAD = 16      # hidden dim padded to a multiple of 8 sublanes
N_PAD = 128     # batch padded to one full lane width


def _simple_nn_kernel(x_ref, p_ref, o_ref):
    # x_ref: (1, N_PAD)  f32  -- batch along lanes
    # p_ref: (J_PAD, 4)  f32  -- columns: [w1 | b1 | w2 | b2 (row 0)], j along sublanes
    # o_ref: (1, N_PAD)  f32
    x = x_ref[...]                         # (1, 128)
    w1 = p_ref[:, 0:1]                     # (16, 1)
    b1 = p_ref[:, 1:2]                     # (16, 1)
    w2 = p_ref[:, 2:3]                     # (16, 1)
    b2 = p_ref[0:1, 3:4]                   # (1, 1)
    # fc1 + ReLU:  h[j, n] = relu(x[n] * w1[j] + b1[j])      (pure VPU broadcasts)
    h = jnp.maximum(w1 * x + b1, 0.0)      # (16, 128)
    # fc2:         y[n]    = sum_j h[j, n] * w2[j] + b2      (16-deep XLU sublane reduce)
    # Padded rows j >= 10 have w1=b1=w2=0, so they contribute exactly 0.
    y = jnp.sum(h * w2, axis=0, keepdims=True) + b2          # (1, 128)
    o_ref[...] = y


def pack_params(w1, b1, w2, b2):
    """Pack PyTorch-shaped params (fc1.weight (10,1), fc1.bias (10,),
    fc2.weight (1,10), fc2.bias (1,)) into a single (J_PAD, 4) f32 slab.
    Call ONCE at init; params are static across forward calls."""
    p = jnp.zeros((J_PAD, 4), jnp.float32)
    p = p.at[:HIDDEN, 0].set(w1.reshape(-1).astype(jnp.float32))
    p = p.at[:HIDDEN, 1].set(b1.reshape(-1).astype(jnp.float32))
    p = p.at[:HIDDEN, 2].set(w2.reshape(-1).astype(jnp.float32))
    p = p.at[0, 3].set(b2.reshape(-1)[0].astype(jnp.float32))
    return p


@jax.jit
def simple_nn_forward(x, p):
    """x: (N, 1), N <= 128; p: (J_PAD, 4) packed param slab. Returns (N, 1)."""
    n = x.shape[0]
    # TODO(synk): for N > 128, tile the batch along a lane-dense grid axis
    # (grid=(pl.cdiv(N, 128),), dimension_semantics=("parallel",)) to use both v7x TCs.
    assert n <= N_PAD, "this fused kernel handles N <= 128"
    x_lanes = jnp.pad(x.reshape(-1).astype(jnp.float32), (0, N_PAD - n)).reshape(1, N_PAD)
    y = pl.pallas_call(
        _simple_nn_kernel,
        out_shape=jax.ShapeDtypeStruct((1, N_PAD), jnp.float32),
        in_specs=[
            pl.BlockSpec(memory_space=pltpu.MemorySpace.VMEM),
            pl.BlockSpec(memory_space=pltpu.MemorySpace.VMEM),
        ],
        out_specs=pl.BlockSpec(memory_space=pltpu.MemorySpace.VMEM),
        cost_estimate=pl.CostEstimate(
            flops=2 * J_PAD * N_PAD * 2,   # two (16,128) multiply-adds
            transcendentals=0,
            bytes_accessed=(1 * N_PAD + J_PAD * 4 + 1 * N_PAD) * 4,
        ),
    )(x_lanes, p)
    return y[0, :n].reshape(n, 1)


def init_params(key):
    """Deterministic init mirroring PyTorch nn.Linear defaults:
    U(-1/sqrt(fan_in), 1/sqrt(fan_in)) for both weight and bias."""
    k1, k2, k3, k4 = jax.random.split(key, 4)
    bound1 = 1.0  # fc1 fan_in = 1
    w1 = jax.random.uniform(k1, (HIDDEN, 1), jnp.float32, -bound1, bound1)
    b1 = jax.random.uniform(k2, (HIDDEN,), jnp.float32, -bound1, bound1)
    bound2 = 1.0 / jnp.sqrt(float(HIDDEN))  # fc2 fan_in = 10
    w2 = jax.random.uniform(k3, (1, HIDDEN), jnp.float32, -bound2, bound2)
    b2 = jax.random.uniform(k4, (1,), jnp.float32, -bound2, bound2)
    return w1, b1, w2, b2


if __name__ == "__main__":
    key = jax.random.PRNGKey(0)
    w1, b1, w2, b2 = init_params(key)

    # Pack parameters once (hoisted out of the per-call forward path).
    p_slab = pack_params(w1, b1, w2, b2)

    # Same input as the reference script: 100 points in [-2, 2], shape (100, 1).
    x = jnp.linspace(-2.0, 2.0, 100, dtype=jnp.float32).reshape(-1, 1)

    out = simple_nn_forward(x, p_slab)
    out = jax.block_until_ready(out)

    # Pure-JAX reference (PyTorch convention: y = relu(x @ W1^T + b1) @ W2^T + b2).
    ref = jnp.maximum(x @ w1.T + b1[None, :], 0.0) @ w2.T + b2[None, :]
    assert out.shape == (100, 1)
    assert jnp.allclose(out, ref, atol=1e-5, rtol=1e-5)

    print("KERNEL_OK")
</pallas_src>

<mosaic_0001>
module attributes {stable_mosaic.version = 11 : i64} {
  func.func @_simple_nn_kernel(%arg0: memref<1x128xf32, #tpu.memory_space<vmem>>, %arg1: memref<16x4xf32, #tpu.memory_space<vmem>>, %arg2: memref<1x128xf32, #tpu.memory_space<vmem>>) attributes {dimension_semantics = [], scalar_prefetch = 0 : i64, scratch_operands = 0 : i64, tpu.core_type = #tpu.core_type<tc>} {
    %c0 = arith.constant 0 : index
    %c0_0 = arith.constant 0 : index
    %0 = vector.load %arg0[%c0, %c0_0] : memref<1x128xf32, #tpu.memory_space<vmem>>, vector<1x128xf32>
    %c0_1 = arith.constant 0 : index
    %c0_2 = arith.constant 0 : index
    %1 = vector.load %arg1[%c0_1, %c0_2] : memref<16x4xf32, #tpu.memory_space<vmem>>, vector<16x1xf32>
    %c0_3 = arith.constant 0 : index
    %c1 = arith.constant 1 : index
    %2 = vector.load %arg1[%c0_3, %c1] : memref<16x4xf32, #tpu.memory_space<vmem>>, vector<16x1xf32>
    %c0_4 = arith.constant 0 : index
    %c2 = arith.constant 2 : index
    %3 = vector.load %arg1[%c0_4, %c2] : memref<16x4xf32, #tpu.memory_space<vmem>>, vector<16x1xf32>
    %c0_5 = arith.constant 0 : index
    %c3 = arith.constant 3 : index
    %4 = vector.load %arg1[%c0_5, %c3] : memref<16x4xf32, #tpu.memory_space<vmem>>, vector<1x1xf32>
    %5 = vector.broadcast %1 : vector<16x1xf32> to vector<16x128xf32>
    %6 = vector.broadcast %0 : vector<1x128xf32> to vector<16x128xf32>
    %7 = arith.mulf %5, %6 : vector<16x128xf32>
    %8 = vector.broadcast %2 : vector<16x1xf32> to vector<16x128xf32>
    %9 = arith.addf %7, %8 : vector<16x128xf32>
    %cst = arith.constant 0.000000e+00 : f32
    %10 = vector.broadcast %cst : f32 to vector<16x128xf32>
    %11 = arith.maximumf %9, %10 : vector<16x128xf32>
    %12 = vector.broadcast %3 : vector<16x1xf32> to vector<16x128xf32>
    %13 = arith.mulf %11, %12 : vector<16x128xf32>
    %cst_6 = arith.constant dense<0.000000e+00> : vector<128xf32>
    %14 = vector.multi_reduction <add>, %13, %cst_6 [0] : vector<16x128xf32> to vector<128xf32>
    %15 = vector.shape_cast %14 : vector<128xf32> to vector<1x128xf32>
    %16 = vector.broadcast %4 : vector<1x1xf32> to vector<1x128xf32>
    %17 = arith.addf %15, %16 : vector<1x128xf32>
    %c0_7 = arith.constant 0 : index
    %c0_8 = arith.constant 0 : index
    %18 = vector.load %arg2[%c0_7, %c0_8] : memref<1x128xf32, #tpu.memory_space<vmem>>, vector<1x128xf32>
    tpu.vector_store %arg2[%c0_7, %c0_8], %17 {strides = array<i32>} : memref<1x128xf32, #tpu.memory_space<vmem>>, vector<1x128xf32>,
    return
  }
}

</mosaic_0001>

<llo_original>
// kernel: simple_nn_forward.1
$region0: #{simple_nn_forward.1}
  #allocation0 [shape = 'u32[]', space=smem, size = 0x4, offset = 0x4, fixed_abs, tag = 'smem constant byte address 0x4 - core index']
  #allocation1 [shape = 'u32[144,128]{1,0:T(1,128)}', space=vmem, size = 0x12000, scoped, tag = 'internal scratch']
  %s0 = inlined_call_operand.vmem [shape: f32[1,128], index: 0, kind: input, shape index: {}]
  %s1 = inlined_call_operand.vmem [shape: f32[16,4], index: 1, kind: input, shape index: {}]
  %s2 = inlined_call_operand.vmem [shape: f32[1,128], index: 2, kind: output, shape index: {}]
  %s3 = sld [smem:[#allocation0]]
  $region18: #{simple_nn_forward.1} parent=0
    _
  %s5 = ssub.s32 1, %s3
  %s6 = scalar_select 0, %s5, %s3
  // Predicated region
  $region2: #{simple_nn_forward.1} parent=0 // pred_check
    _
  $region3: #{simple_nn_forward.1} parent=0 // pred_check_branch
    %8 = sbr.rel (0) target = $region5
  $region4: #{simple_nn_forward.1} parent=0 // pred_region
    _
  $region5: #{simple_nn_forward.1} parent=0 // pred_fallthru
    _
  // Predicated region
  $region6: #{simple_nn_forward.1} parent=0 // pred_check
    _
  $region7: #{simple_nn_forward.1} parent=0 // pred_check_branch
    %10 = sbr.rel (0) target = $region9
  $region8: #{simple_nn_forward.1} parent=0 // pred_region
    _
  $region9: #{simple_nn_forward.1} parent=0 // pred_fallthru
    _
  %v11 = vld [vmem:[%s0] sm:$0x1]
  %v12 = vld [vmem:[%s1] sm:$0xff]
  %v13 = vld [vmem:[%s1 + $0x8] sm:$0xff]
  %v14 = vld [vmem:[%s1] sm:$0x1]
  %16 = vset.pattern.permute.xlu0 0
  %17 = vperm.xlu0 %16, %v12
  %v18 = vpop.permute.xlu0 %17
  %21 = vset.pattern.permute.xlu0 0
  %22 = vperm.xlu0 %21, %v13
  %v23 = vpop.permute.xlu0 %22
  %v26 = vlaneseq
  %v27 = vshrl.u32 %v26, 7
  %v28 = vsub.s32 0, %v27
  %v29 = vrot.slane %v11, %v28
  %v31 = vmul.f32 %v18, %v29
  %v32 = vmul.f32 %v23, %v29
  %33 = vset.pattern.permute.xlu0 1
  %34 = vperm.xlu0 %33, %v12
  %v35 = vpop.permute.xlu0 %34
  %37 = vset.pattern.permute.xlu0 1
  %38 = vperm.xlu0 %37, %v13
  %v39 = vpop.permute.xlu0 %38
  %v41 = vadd.f32 %v31, %v35
  %v42 = vadd.f32 %v32, %v39
  %v43 = vmax.f32 %v41, 0.0
  %v44 = vmax.f32 %v42, 0.0
  %45 = vset.pattern.permute.xlu0 2
  %46 = vperm.xlu0 %45, %v12
  %v47 = vpop.permute.xlu0 %46
  %49 = vset.pattern.permute.xlu0 2
  %50 = vperm.xlu0 %49, %v13
  %v51 = vpop.permute.xlu0 %50
  %v53 = vmul.f32 %v43, %v47
  %v54 = vmul.f32 %v44, %v51
  %v55 = vadd.f32 %v53, %v54
  %v56 = vrot.slane %v55, 4
  %v57 = vadd.f32 %v55, %v56
  %v58 = vrot.slane %v57, 2
  %v59 = vadd.f32 %v57, %v58
  %v60 = vrot.slane %v59, 1
  %v61 = vadd.f32 %v59, %v60
  %63 = vset.pattern.permute.xlu0 3
  %64 = vperm.xlu0 %63, %v14
  %v65 = vpop.permute.xlu0 %64
  %v67 = vadd.f32 %v61, %v65
  %68 = vst [vmem:[%s2] sm:$0x1] %v67
  // Predicated region
  $region10: #{simple_nn_forward.1} parent=0 // pred_check
    _
  $region11: #{simple_nn_forward.1} parent=0 // pred_check_branch
    %70 = sbr.rel (0) target = $region13
  $region12: #{simple_nn_forward.1} parent=0 // pred_region
    _
  $region13: #{simple_nn_forward.1} parent=0 // pred_fallthru
    _
  // Predicated region
  $region14: #{simple_nn_forward.1} parent=0 // pred_check
    _
  $region15: #{simple_nn_forward.1} parent=0 // pred_check_branch
    %72 = sbr.rel (0) target = $region17
  $region16: #{simple_nn_forward.1} parent=0 // pred_region
    _
  $region17: #{simple_nn_forward.1} parent=0 // pred_fallthru
    _

</llo_original>
